<compile_context>
chip_gen: v5e
topology: v5e:2x2
jax: 0.10.0
libtpu: 0.0.40
codegen_flags: <defaults>
</compile_context>

<pallas_src>
import functools

import jax
import jax.numpy as jnp
from jax.experimental import pallas as pl
from jax.experimental.pallas import tpu as pltpu


# ---------------------------------------------------------------------------
# Kernel
# ---------------------------------------------------------------------------
def _fused_relu_conv1x1_kernel(layer_map, *refs):
    """refs = (x_ref, w0_ref, b0_ref, ..., w{U-1}_ref, b{U-1}_ref, o_ref).

    x_ref : (Bn, Cin, T)   activation block (T = HW tile on the lane axis)
    w_ref : (Cout, Cin)    resident (deduplicated) weight
    b_ref : (Cout, 1)      resident bias (f32)
    o_ref : (Bn, Cout, T)
    layer_map : static tuple, per-layer index into the unique (w, b) refs.
    """
    x_ref, o_ref = refs[0], refs[-1]
    layer_refs = refs[1:-1]
    n_unique = len(layer_refs) // 2

    # Hoist the unique weight/bias loads out of the fused layer / batch loops.
    ws = [layer_refs[2 * u][...] for u in range(n_unique)]
    bs = [layer_refs[2 * u + 1][...].astype(jnp.float32) for u in range(n_unique)]

    bn = x_ref.shape[0]
    for i in range(bn):                      # static unroll over batch block
        h = x_ref[i]                         # (Cin, T), storage dtype
        for u in layer_map:                  # static unroll over fused layers
            h = jnp.maximum(h, 0.0)          # nl_layer() == ReLU
            h = jnp.dot(ws[u], h.astype(ws[u].dtype),
                        preferred_element_type=jnp.float32)   # MXU, f32 acc
            h = h + bs[u]                    # bias add in f32
        o_ref[i] = h.astype(o_ref.dtype)


# ---------------------------------------------------------------------------
# Hardware / tiling heuristics
# ---------------------------------------------------------------------------
def _cdiv(a, b):
    return -(-a // b)


def _round_up(x, m):
    return _cdiv(x, m) * m


def _num_tensorcores():
    """TensorCores per chip that 'parallel' grid axes can shard across."""
    try:
        kind = jax.devices()[0].device_kind.lower()
    except Exception:
        return 1
    return 2 if any(v in kind for v in ("v7", "v4", "v5p")) else 1


def _vmem_capacity_bytes():
    """Physical VMEM per TensorCore (128 MiB v5e/v6e, 64 MiB v7x)."""
    try:
        cap = getattr(pltpu.get_tpu_info(), "vmem_capacity_bytes", None)
        if cap:
            return int(cap)
    except Exception:
        pass
    try:
        kind = jax.devices()[0].device_kind.lower()
    except Exception:
        kind = ""
    if any(v in kind for v in ("v5 lite", "v5e", "v6 lite", "v6e", "v5p", "v4")):
        return 128 << 20
    return 64 << 20   # conservative (v7x per-TC VMEM)


def _choose_blocking(N, HW, Cin, Cout, cmax, store_isz, out_isz, *, num_tc, vmem_cap):
    """Pick (hw_tile, batch_block). Large lane tiles amortize the ~0.35us/step
    pipeline overhead; small feature maps batch several images per step."""
    hw_pad = _round_up(HW, 128)
    cap = 4096 if vmem_cap <= (64 << 20) else 8192        # tile cap per generation
    budget = (vmem_cap * 3) // 8                          # ~24 MiB v7x / ~48 MiB v5e,v6e

    def step_bytes(bn, t):
        # double-buffered x/out blocks + live f32 intermediates
        blocks = 2 * bn * t * (Cin * store_isz + Cout * out_isz)
        temps = 2 * bn * cmax * t * 4
        return blocks + temps

    t = min(cap, hw_pad)
    while t > 128 and step_bytes(1, t) > budget:
        t -= 128

    bn = 1
    if _cdiv(HW, t) == 1 and N > 1:
        # Whole spatial extent fits one tile: pack several images per grid step.
        while (bn * 2 <= N and bn * 2 * hw_pad <= cap
               and step_bytes(bn * 2, t) <= budget):
            bn *= 2
        # Keep >= num_tc grid programs so 'parallel' axes can shard across cores.
        while bn > 1 and _cdiv(N, bn) < num_tc:
            bn //= 2

    # Single-program grid on a multi-core chip: split the HW tile instead.
    if _cdiv(N, bn) * _cdiv(HW, t) < num_tc and t > 128:
        t = _round_up(_cdiv(t, num_tc), 128)

    return t, bn


def _vmem_limit_bytes(bn, t, Cin, Cout, cmax, uniq_cast, store_isz, out_isz, vmem_cap):
    blocks = 2 * bn * t * (Cin * store_isz + Cout * out_isz)       # double-buffered x / out
    weights = 2 * sum(int(w.size) * w.dtype.itemsize + int(b.size) * b.dtype.itemsize
                      for (w, b) in uniq_cast)                      # deduplicated, double-buffered
    temps = 2 * bn * cmax * t * 4                                   # f32 intermediates
    est = blocks + weights + temps + (2 << 20)                      # + compiler slack
    return int(min((vmem_cap * 3) // 4, max(16 << 20, est)))        # <= 75% of physical VMEM


# ---------------------------------------------------------------------------
# Wrapper (full module forward)
# ---------------------------------------------------------------------------
def conv2d_1x1_forward(x_nchw, params, *, compute_dtype=jnp.bfloat16,
                       out_dtype=None, tile_hw=None, batch_block=None):
    """x_nchw : (N, C_in, H, W)
    params : list of (w_t, b) per layer, w_t: (C_out, C_in), b: (C_out, 1) or (C_out,)
             (the PyTorch module repeats the SAME conv, so entries alias)
    compute_dtype : HBM storage + MXU-operand dtype (bf16 default; f32 accumulation)
    returns (N, C_out, H, W) in out_dtype (defaults to compute_dtype)
    """
    N, C, H, W = x_nchw.shape
    HW = H * W
    L = len(params)
    assert L >= 1
    assert params[0][0].shape[1] == C, "first layer Cin must match input channels"
    for l in range(1, L):
        assert params[l][0].shape[1] == params[l - 1][0].shape[0]
    Cout = params[-1][0].shape[0]

    compute_dtype = jnp.dtype(compute_dtype)
    out_dtype = jnp.dtype(out_dtype) if out_dtype is not None else compute_dtype

    # Deduplicate the shared conv: pass each unique (W, b) once, index per layer.
    uniq, layer_map, seen = [], [], {}
    for (w, b) in params:
        key = (id(w), id(b))
        if key not in seen:
            seen[key] = len(uniq)
            uniq.append((w, b))
        layer_map.append(seen[key])

    # x / weights stored (and fed to the MXU) in compute_dtype; bias kept f32 (tiny).
    uniq_cast = [(w.astype(compute_dtype), b.reshape(-1, 1).astype(jnp.float32))
                 for (w, b) in uniq]
    x3 = x_nchw.reshape(N, C, HW).astype(compute_dtype)   # free reshape, cheap cast

    cmax = max(max(w.shape) for (w, _) in uniq)
    store_isz = compute_dtype.itemsize
    out_isz = out_dtype.itemsize
    num_tc = _num_tensorcores()
    vmem_cap = _vmem_capacity_bytes()

    t, bn = _choose_blocking(N, HW, C, Cout, cmax, store_isz, out_isz,
                             num_tc=num_tc, vmem_cap=vmem_cap)
    if tile_hw is not None:
        t = tile_hw
    if batch_block is not None:
        bn = batch_block

    grid = (_cdiv(N, bn), _cdiv(HW, t))

    in_specs = [pl.BlockSpec((bn, C, t), lambda n, j: (n, 0, j))]
    flat_params = []
    for (w, b) in uniq_cast:
        co, ci = w.shape
        # Constant index_map -> weights/bias stay resident in VMEM across the grid.
        in_specs.append(pl.BlockSpec((co, ci), lambda n, j: (0, 0)))
        in_specs.append(pl.BlockSpec((co, 1), lambda n, j: (0, 0)))
        flat_params += [w, b]
    out_spec = pl.BlockSpec((bn, Cout, t), lambda n, j: (n, 0, j))

    flops = 2 * N * HW * sum(w.shape[0] * w.shape[1] for (w, _) in params)
    bytes_accessed = (x3.size * store_isz + N * Cout * HW * out_isz
                      + sum(int(w.size) * w.dtype.itemsize + int(b.size) * b.dtype.itemsize
                            for (w, b) in uniq_cast))

    out3 = pl.pallas_call(
        functools.partial(_fused_relu_conv1x1_kernel, tuple(layer_map)),
        out_shape=jax.ShapeDtypeStruct((N, Cout, HW), out_dtype),
        grid_spec=pltpu.PrefetchScalarGridSpec(
            num_scalar_prefetch=0,
            grid=grid,
            in_specs=in_specs,
            out_specs=out_spec,
        ),
        compiler_params=pltpu.CompilerParams(
            dimension_semantics=("parallel", "parallel"),
            vmem_limit_bytes=_vmem_limit_bytes(
                bn, t, C, Cout, cmax, uniq_cast, store_isz, out_isz, vmem_cap),
        ),
        cost_estimate=pl.CostEstimate(
            flops=int(flops), transcendentals=0, bytes_accessed=int(bytes_accessed)),
    )(x3, *flat_params)

    return out3.reshape(N, Cout, H, W)


# ---------------------------------------------------------------------------
# Params + reference
# ---------------------------------------------------------------------------
def init_params(key, input_nc=128, output_nc=128, n_layers=1, dtype=jnp.float32):
    """Conv2d(k=1) init (kaiming-uniform-like).  Matches the PyTorch module,
    which reuses the SAME conv for every repeat, so the list repeats one
    (w_t, b) pair.  w_t: (Cout, Cin)  (== conv weight (Cout,Cin,1,1) squeezed)."""
    assert n_layers == 1 or input_nc == output_nc
    kw, kb = jax.random.split(key)
    bound = 1.0 / float(input_nc) ** 0.5
    w_t = jax.random.uniform(kw, (output_nc, input_nc), dtype, -bound, bound)
    b = jax.random.uniform(kb, (output_nc, 1), dtype, -bound, bound)
    return [(w_t, b)] * n_layers


def _reference(x_nchw, params, compute_dtype=jnp.float32):
    """Pure-JAX reference: (Conv1x1 ∘ ReLU)^L in NCHW, emulating the kernel's
    storage dtype (matmul operands cast to compute_dtype, accumulation in f32)."""
    h = x_nchw
    for (w, b) in params:
        h = jnp.maximum(h, 0.0).astype(compute_dtype)
        h = jnp.einsum("nchw,oc->nohw", h, w.astype(compute_dtype),
                       preferred_element_type=jnp.float32)
        h = h + b.reshape(1, -1, 1, 1).astype(jnp.float32)
    return h


if __name__ == "__main__":
    key = jax.random.PRNGKey(0)
    kx, kp = jax.random.split(key)

    # Module defaults: input_nc = output_nc = 128; small spatial extent.
    N, C, H, W = 2, 128, 16, 16
    n_layers = 2   # exercises the fused multi-layer path (shared conv, like the module)

    x = jax.random.normal(kx, (N, C, H, W), jnp.float32)
    params = init_params(kp, input_nc=C, output_nc=C, n_layers=n_layers)

    # f32 path: matches the PyTorch module numerics tightly.
    out_f32 = jax.block_until_ready(
        conv2d_1x1_forward(x, params, compute_dtype=jnp.float32))
    ref_f32 = _reference(x, params, compute_dtype=jnp.float32)
    assert out_f32.shape == (N, C, H, W) and out_f32.dtype == jnp.float32
    assert jnp.allclose(out_f32, ref_f32, atol=1e-3, rtol=1e-3), "f32 mismatch vs reference"

    # bf16 path (default): HBM-bandwidth-optimized storage + MXU operands.
    out_bf16 = jax.block_until_ready(conv2d_1x1_forward(x, params))
    ref_bf16 = _reference(x, params, compute_dtype=jnp.bfloat16)
    assert out_bf16.shape == (N, C, H, W) and out_bf16.dtype == jnp.bfloat16
    assert jnp.allclose(out_bf16.astype(jnp.float32), ref_bf16.astype(jnp.float32),
                        atol=2e-2, rtol=2e-2), "bf16 mismatch vs reference"

    print("KERNEL_OK")
</pallas_src>

<mosaic_0001>
module attributes {stable_mosaic.version = 11 : i64} {
  func.func @_fused_relu_conv1x1_kernel(%arg0: i32, %arg1: i32, %arg2: memref<2x128x256xf32, #tpu.memory_space<vmem>>, %arg3: memref<128x128xf32, #tpu.memory_space<vmem>>, %arg4: memref<128x1xf32, #tpu.memory_space<vmem>>, %arg5: memref<2x128x256xf32, #tpu.memory_space<vmem>>) attributes {dimension_semantics = [#tpu.dimension_semantics<parallel>, #tpu.dimension_semantics<parallel>], iteration_bounds = array<i64: 1, 1>, scalar_prefetch = 0 : i64, scratch_operands = 0 : i64, tpu.core_type = #tpu.core_type<tc>, window_params = [{transform_indices = @transform_0, window_bounds = array<i64: 2, 128, 256>}, {pipeline_mode = #tpu.pipeline_mode<synchronous>, transform_indices = @transform_1, window_bounds = array<i64: 128, 128>}, {pipeline_mode = #tpu.pipeline_mode<synchronous>, transform_indices = @transform_2, window_bounds = array<i64: 128, 1>}, {transform_indices = @transform_3, window_bounds = array<i64: 2, 128, 256>}]} {
    %c0 = arith.constant 0 : index
    %c0_0 = arith.constant 0 : index
    %0 = vector.load %arg3[%c0, %c0_0] : memref<128x128xf32, #tpu.memory_space<vmem>>, vector<128x128xf32>
    %c0_1 = arith.constant 0 : index
    %c0_2 = arith.constant 0 : index
    %1 = vector.load %arg4[%c0_1, %c0_2] : memref<128x1xf32, #tpu.memory_space<vmem>>, vector<128x1xf32>
    %c0_3 = arith.constant 0 : index
    %c0_4 = arith.constant 0 : index
    %c0_5 = arith.constant 0 : index
    %2 = vector.load %arg2[%c0_3, %c0_4, %c0_5] : memref<2x128x256xf32, #tpu.memory_space<vmem>>, vector<1x128x256xf32>
    %3 = vector.shape_cast %2 : vector<1x128x256xf32> to vector<128x256xf32>
    %cst = arith.constant 0.000000e+00 : f32
    %4 = vector.broadcast %cst : f32 to vector<128x256xf32>
    %5 = arith.maximumf %3, %4 : vector<128x256xf32>
    %cst_6 = arith.constant dense<0.000000e+00> : vector<128x256xf32>
    %6 = tpu.matmul %0, %5, %cst_6 {dimension_numbers = #tpu.dot_dimension_numbers<[1], [0], [0], [1], [0, 0, 1, 1], [], []>} : vector<128x128xf32>, vector<128x256xf32>, vector<128x256xf32> -> vector<128x256xf32>
    %7 = vector.broadcast %1 : vector<128x1xf32> to vector<128x256xf32>
    %8 = arith.addf %6, %7 : vector<128x256xf32>
    %cst_7 = arith.constant 0.000000e+00 : f32
    %9 = vector.broadcast %cst_7 : f32 to vector<128x256xf32>
    %10 = arith.maximumf %8, %9 : vector<128x256xf32>
    %cst_8 = arith.constant dense<0.000000e+00> : vector<128x256xf32>
    %11 = tpu.matmul %0, %10, %cst_8 {dimension_numbers = #tpu.dot_dimension_numbers<[1], [0], [0], [1], [0, 0, 1, 1], [], []>} : vector<128x128xf32>, vector<128x256xf32>, vector<128x256xf32> -> vector<128x256xf32>
    %12 = vector.broadcast %1 : vector<128x1xf32> to vector<128x256xf32>
    %13 = arith.addf %11, %12 : vector<128x256xf32>
    %c0_9 = arith.constant 0 : index
    %c0_10 = arith.constant 0 : index
    %c0_11 = arith.constant 0 : index
    %14 = vector.load %arg5[%c0_9, %c0_10, %c0_11] : memref<2x128x256xf32, #tpu.memory_space<vmem>>, vector<1x128x256xf32>
    %15 = vector.shape_cast %14 : vector<1x128x256xf32> to vector<128x256xf32>
    %16 = vector.shape_cast %13 : vector<128x256xf32> to vector<1x128x256xf32>
    tpu.vector_store %arg5[%c0_9, %c0_10, %c0_11], %16 {strides = array<i32>} : memref<2x128x256xf32, #tpu.memory_space<vmem>>, vector<1x128x256xf32>,
    %c1 = arith.constant 1 : index
    %c0_12 = arith.constant 0 : index
    %c0_13 = arith.constant 0 : index
    %17 = vector.load %arg2[%c1, %c0_12, %c0_13] : memref<2x128x256xf32, #tpu.memory_space<vmem>>, vector<1x128x256xf32>
    %18 = vector.shape_cast %17 : vector<1x128x256xf32> to vector<128x256xf32>
    %cst_14 = arith.constant 0.000000e+00 : f32
    %19 = vector.broadcast %cst_14 : f32 to vector<128x256xf32>
    %20 = arith.maximumf %18, %19 : vector<128x256xf32>
    %cst_15 = arith.constant dense<0.000000e+00> : vector<128x256xf32>
    %21 = tpu.matmul %0, %20, %cst_15 {dimension_numbers = #tpu.dot_dimension_numbers<[1], [0], [0], [1], [0, 0, 1, 1], [], []>} : vector<128x128xf32>, vector<128x256xf32>, vector<128x256xf32> -> vector<128x256xf32>
    %22 = vector.broadcast %1 : vector<128x1xf32> to vector<128x256xf32>
    %23 = arith.addf %21, %22 : vector<128x256xf32>
    %cst_16 = arith.constant 0.000000e+00 : f32
    %24 = vector.broadcast %cst_16 : f32 to vector<128x256xf32>
    %25 = arith.maximumf %23, %24 : vector<128x256xf32>
    %cst_17 = arith.constant dense<0.000000e+00> : vector<128x256xf32>
    %26 = tpu.matmul %0, %25, %cst_17 {dimension_numbers = #tpu.dot_dimension_numbers<[1], [0], [0], [1], [0, 0, 1, 1], [], []>} : vector<128x128xf32>, vector<128x256xf32>, vector<128x256xf32> -> vector<128x256xf32>
    %27 = vector.broadcast %1 : vector<128x1xf32> to vector<128x256xf32>
    %28 = arith.addf %26, %27 : vector<128x256xf32>
    %c1_18 = arith.constant 1 : index
    %c0_19 = arith.constant 0 : index
    %c0_20 = arith.constant 0 : index
    %29 = vector.load %arg5[%c1_18, %c0_19, %c0_20] : memref<2x128x256xf32, #tpu.memory_space<vmem>>, vector<1x128x256xf32>
    %30 = vector.shape_cast %29 : vector<1x128x256xf32> to vector<128x256xf32>
    %31 = vector.shape_cast %28 : vector<128x256xf32> to vector<1x128x256xf32>
    tpu.vector_store %arg5[%c1_18, %c0_19, %c0_20], %31 {strides = array<i32>} : memref<2x128x256xf32, #tpu.memory_space<vmem>>, vector<1x128x256xf32>,
    return
  }
  func.func @transform_0(%arg0: i32, %arg1: i32) -> (i32, i32, i32) {
    %c0_i32 = arith.constant 0 : i32
    %c0_i32_0 = arith.constant 0 : i32
    return %arg0, %c0_i32, %arg1 : i32, i32, i32
  }
  func.func @transform_1(%arg0: i32, %arg1: i32) -> (i32, i32) {
    %c0_i32 = arith.constant 0 : i32
    %c0_i32_0 = arith.constant 0 : i32
    %c0_i32_1 = arith.constant 0 : i32
    return %c0_i32, %c0_i32_0 : i32, i32
  }
  func.func @transform_2(%arg0: i32, %arg1: i32) -> (i32, i32) {
    %c0_i32 = arith.constant 0 : i32
    %c0_i32_0 = arith.constant 0 : i32
    %c0_i32_1 = arith.constant 0 : i32
    return %c0_i32, %c0_i32_0 : i32, i32
  }
  func.func @transform_3(%arg0: i32, %arg1: i32) -> (i32, i32, i32) {
    %c0_i32 = arith.constant 0 : i32
    %c0_i32_0 = arith.constant 0 : i32
    return %arg0, %c0_i32, %arg1 : i32, i32, i32
  }
}

</mosaic_0001>

<llo_original>
// kernel: tpu_custom_call.1
$region0: #{tpu_custom_call.1}
  #allocation0 [shape = 'u32[]', space=smem, size = 0x4, offset = 0x4, fixed_abs, tag = 'smem constant byte address 0x4 - core index']
  #allocation1 [shape = 'u32[72,128]{1,0:T(1,128)}', space=vmem, size = 0x9000, scoped, tag = 'internal scratch']
  %s0 = inlined_call_operand.hbm [shape: f32[2,128,256], index: 0, kind: input, shape index: {}]
  %s1 = inlined_call_operand.vmem [shape: f32[128,128], index: 1, kind: input, shape index: {}]
  %s2 = inlined_call_operand.vmem [shape: f32[128,1], index: 2, kind: input, shape index: {}]
  %s3 = inlined_call_operand.hbm [shape: f32[2,128,256], index: 3, kind: output, shape index: {}]
  %s4 = sld [smem:[#allocation0]]
  $region26: #{tpu_custom_call.1} parent=0
    _
  %s6 = ssub.s32 1, %s4
  %s7 = scalar_select 0, %s6, %s4
  $region1: #{tpu_custom_call.1} parent=0
    #allocation2 [shape = 'u8[262144]{0}', space=vmem, size = 0x40000, scoped, tag = 'input window, operand 0, single buffered']
    #allocation3 [shape = 's32[1]{0}', space=sflag, size = 0x4, scoped, tag = 'scoped memory for tpu_custom_call.1']
    #allocation4 [shape = 's32[1]{0}', space=sflag, size = 0x4, scoped, tag = 'scoped memory for tpu_custom_call.1']
    #allocation5 [shape = 'u8[262144]{0}', space=vmem, size = 0x40000, scoped, tag = 'output window, operand 0, single buffered']
    %8 = vsyncpa [#allocation3], 0
    %9 = vsyncpa [#allocation4], 0
    // Predicated region
    $region2: #{tpu_custom_call.1} parent=1 // pred_check
      _
    $region3: #{tpu_custom_call.1} parent=1 // pred_check_branch
      %11 = sbr.rel (0) target = $region5
    $region4: #{tpu_custom_call.1} parent=1 // pred_region
      %13 = vsyncadd [#allocation3], 0
      %s14 = sshll.u32 %s0, 4
      %s15 = int_to_ptr.hbm [resolvable:$true] %s14
      %s16 = sshll.u32 [#allocation2], 4
      %s17 = int_to_ptr.vmem [resolvable:$true] %s16
      %22 = dma.hbm_to_vmem [thread:$0]  %s15, 8192, %s17, [#allocation3], 256, 256, 16
    $region5: #{tpu_custom_call.1} parent=1 // pred_fallthru
      _
    // Predicated region
    $region6: #{tpu_custom_call.1} parent=1 // pred_check
      _
    $region7: #{tpu_custom_call.1} parent=1 // pred_check_branch
      %24 = sbr.rel (0) target = $region9
    $region8: #{tpu_custom_call.1} parent=1 // pred_region
      _
    $region9: #{tpu_custom_call.1} parent=1 // pred_fallthru
      _
    // Predicated region
    $region10: #{tpu_custom_call.1} parent=1 // pred_check
      _
    $region11: #{tpu_custom_call.1} parent=1 // pred_check_branch
      %26 = sbr.rel (0) target = $region13
    $region12: #{tpu_custom_call.1} parent=1 // pred_region
      _
    $region13: #{tpu_custom_call.1} parent=1 // pred_fallthru
      _
    // Predicated region
    $region14: #{tpu_custom_call.1} parent=1 // pred_check
      _
    $region15: #{tpu_custom_call.1} parent=1 // pred_check_branch
      %28 = sbr.rel (0) target = $region17
    $region16: #{tpu_custom_call.1} parent=1 // pred_region
      %30 = dma.done [#allocation3], 8192
    $region17: #{tpu_custom_call.1} parent=1 // pred_fallthru
      _
    %v31 = vld [vmem:[%s1] sm:$0xff]
    %v32 = vld [vmem:[%s1 + $0x8] sm:$0xff]
    %v33 = vld [vmem:[%s1 + $0x10] sm:$0xff]
    %v34 = vld [vmem:[%s1 + $0x18] sm:$0xff]
    %v35 = vld [vmem:[%s1 + $0x20] sm:$0xff]
    %v36 = vld [vmem:[%s1 + $0x28] sm:$0xff]
    %v37 = vld [vmem:[%s1 + $0x30] sm:$0xff]
    %v38 = vld [vmem:[%s1 + $0x38] sm:$0xff]
    %v39 = vld [vmem:[%s1 + $0x40] sm:$0xff]
    %v40 = vld [vmem:[%s1 + $0x48] sm:$0xff]
    %v41 = vld [vmem:[%s1 + $0x50] sm:$0xff]
    %v42 = vld [vmem:[%s1 + $0x58] sm:$0xff]
    %v43 = vld [vmem:[%s1 + $0x60] sm:$0xff]
    %v44 = vld [vmem:[%s1 + $0x68] sm:$0xff]
    %v45 = vld [vmem:[%s1 + $0x70] sm:$0xff]
    %v46 = vld [vmem:[%s1 + $0x78] sm:$0xff]
    %v47 = vld [vmem:[%s2] sm:$0xff]
    %v48 = vld [vmem:[%s2 + $0x8] sm:$0xff]
    %v49 = vld [vmem:[%s2 + $0x10] sm:$0xff]
    %v50 = vld [vmem:[%s2 + $0x18] sm:$0xff]
    %v51 = vld [vmem:[%s2 + $0x20] sm:$0xff]
    %v52 = vld [vmem:[%s2 + $0x28] sm:$0xff]
    %v53 = vld [vmem:[%s2 + $0x30] sm:$0xff]
    %v54 = vld [vmem:[%s2 + $0x38] sm:$0xff]
    %v55 = vld [vmem:[%s2 + $0x40] sm:$0xff]
    %v56 = vld [vmem:[%s2 + $0x48] sm:$0xff]
    %v57 = vld [vmem:[%s2 + $0x50] sm:$0xff]
    %v58 = vld [vmem:[%s2 + $0x58] sm:$0xff]
    %v59 = vld [vmem:[%s2 + $0x60] sm:$0xff]
    %v60 = vld [vmem:[%s2 + $0x68] sm:$0xff]
    %v61 = vld [vmem:[%s2 + $0x70] sm:$0xff]
    %v62 = vld [vmem:[%s2 + $0x78] sm:$0xff]
    %v63 = vld [vmem:[#allocation2] sm:$0xff]
    %v64 = vld [vmem:[#allocation2 + $0x8] sm:$0xff]
    %v65 = vld [vmem:[#allocation2 + $0x10] sm:$0xff]
    %v66 = vld [vmem:[#allocation2 + $0x18] sm:$0xff]
    %v67 = vld [vmem:[#allocation2 + $0x20] sm:$0xff]
    %v68 = vld [vmem:[#allocation2 + $0x28] sm:$0xff]
    %v69 = vld [vmem:[#allocation2 + $0x30] sm:$0xff]
    %v70 = vld [vmem:[#allocation2 + $0x38] sm:$0xff]
    %v71 = vld [vmem:[#allocation2 + $0x40] sm:$0xff]
    %v72 = vld [vmem:[#allocation2 + $0x48] sm:$0xff]
    %v73 = vld [vmem:[#allocation2 + $0x50] sm:$0xff]
    %v74 = vld [vmem:[#allocation2 + $0x58] sm:$0xff]
    %v75 = vld [vmem:[#allocation2 + $0x60] sm:$0xff]
    %v76 = vld [vmem:[#allocation2 + $0x68] sm:$0xff]
    %v77 = vld [vmem:[#allocation2 + $0x70] sm:$0xff]
    %v78 = vld [vmem:[#allocation2 + $0x78] sm:$0xff]
    %v79 = vld [vmem:[#allocation2 + $0x80] sm:$0xff]
    %v80 = vld [vmem:[#allocation2 + $0x88] sm:$0xff]
    %v81 = vld [vmem:[#allocation2 + $0x90] sm:$0xff]
    %v82 = vld [vmem:[#allocation2 + $0x98] sm:$0xff]
    %v83 = vld [vmem:[#allocation2 + $0xa0] sm:$0xff]
    %v84 = vld [vmem:[#allocation2 + $0xa8] sm:$0xff]
    %v85 = vld [vmem:[#allocation2 + $0xb0] sm:$0xff]
    %v86 = vld [vmem:[#allocation2 + $0xb8] sm:$0xff]
    %v87 = vld [vmem:[#allocation2 + $0xc0] sm:$0xff]
    %v88 = vld [vmem:[#allocation2 + $0xc8] sm:$0xff]
    %v89 = vld [vmem:[#allocation2 + $0xd0] sm:$0xff]
    %v90 = vld [vmem:[#allocation2 + $0xd8] sm:$0xff]
    %v91 = vld [vmem:[#allocation2 + $0xe0] sm:$0xff]
    %v92 = vld [vmem:[#allocation2 + $0xe8] sm:$0xff]
    %v93 = vld [vmem:[#allocation2 + $0xf0] sm:$0xff]
    %v94 = vld [vmem:[#allocation2 + $0xf8] sm:$0xff]
    %v95 = vmax.f32 %v63, 0.0
    %v96 = vmax.f32 %v64, 0.0
    %v97 = vmax.f32 %v65, 0.0
    %v98 = vmax.f32 %v66, 0.0
    %v99 = vmax.f32 %v67, 0.0
    %v100 = vmax.f32 %v68, 0.0
    %v101 = vmax.f32 %v69, 0.0
    %v102 = vmax.f32 %v70, 0.0
    %v103 = vmax.f32 %v71, 0.0
    %v104 = vmax.f32 %v72, 0.0
    %v105 = vmax.f32 %v73, 0.0
    %v106 = vmax.f32 %v74, 0.0
    %v107 = vmax.f32 %v75, 0.0
    %v108 = vmax.f32 %v76, 0.0
    %v109 = vmax.f32 %v77, 0.0
    %v110 = vmax.f32 %v78, 0.0
    %v111 = vmax.f32 %v79, 0.0
    %v112 = vmax.f32 %v80, 0.0
    %v113 = vmax.f32 %v81, 0.0
    %v114 = vmax.f32 %v82, 0.0
    %v115 = vmax.f32 %v83, 0.0
    %v116 = vmax.f32 %v84, 0.0
    %v117 = vmax.f32 %v85, 0.0
    %v118 = vmax.f32 %v86, 0.0
    %v119 = vmax.f32 %v87, 0.0
    %v120 = vmax.f32 %v88, 0.0
    %v121 = vmax.f32 %v89, 0.0
    %v122 = vmax.f32 %v90, 0.0
    %v123 = vmax.f32 %v91, 0.0
    %v124 = vmax.f32 %v92, 0.0
    %v125 = vmax.f32 %v93, 0.0
    %v126 = vmax.f32 %v94, 0.0
    %128 = vset.pattern.permute.xlu0 0
    %129 = vperm.xlu0 %128, %v47
    %v130 = vpop.permute.xlu0 %129
    %133 = vset.pattern.permute.xlu0 0
    %134 = vperm.xlu0 %133, %v48
    %v135 = vpop.permute.xlu0 %134
    %138 = vset.pattern.permute.xlu0 0
    %139 = vperm.xlu0 %138, %v49
    %v140 = vpop.permute.xlu0 %139
    %143 = vset.pattern.permute.xlu0 0
    %144 = vperm.xlu0 %143, %v50
    %v145 = vpop.permute.xlu0 %144
    %148 = vset.pattern.permute.xlu0 0
    %149 = vperm.xlu0 %148, %v51
    %v150 = vpop.permute.xlu0 %149
    %153 = vset.pattern.permute.xlu0 0
    %154 = vperm.xlu0 %153, %v52
    %v155 = vpop.permute.xlu0 %154
    %158 = vset.pattern.permute.xlu0 0
    %159 = vperm.xlu0 %158, %v53
    %v160 = vpop.permute.xlu0 %159
    %163 = vset.pattern.permute.xlu0 0
    %164 = vperm.xlu0 %163, %v54
    %v165 = vpop.permute.xlu0 %164
    %168 = vset.pattern.permute.xlu0 0
    %169 = vperm.xlu0 %168, %v55
    %v170 = vpop.permute.xlu0 %169
    %173 = vset.pattern.permute.xlu0 0
    %174 = vperm.xlu0 %173, %v56
    %v175 = vpop.permute.xlu0 %174
    %178 = vset.pattern.permute.xlu0 0
    %179 = vperm.xlu0 %178, %v57
    %v180 = vpop.permute.xlu0 %179
    %183 = vset.pattern.permute.xlu0 0
    %184 = vperm.xlu0 %183, %v58
    %v185 = vpop.permute.xlu0 %184
    %188 = vset.pattern.permute.xlu0 0
    %189 = vperm.xlu0 %188, %v59
    %v190 = vpop.permute.xlu0 %189
    %193 = vset.pattern.permute.xlu0 0
    %194 = vperm.xlu0 %193, %v60
    %v195 = vpop.permute.xlu0 %194
    %198 = vset.pattern.permute.xlu0 0
    %199 = vperm.xlu0 %198, %v61
    %v200 = vpop.permute.xlu0 %199
    %203 = vset.pattern.permute.xlu0 0
    %204 = vperm.xlu0 %203, %v62
    %v205 = vpop.permute.xlu0 %204
    %207 = vmatpush.msra.mxu0 %v125
    %208 = vmatpush.msra.mxu0 %v123
    %209 = vmatpush.msra.mxu0 %v121
    %210 = vmatpush.msra.mxu0 %v119
    %211 = vmatpush.msra.mxu0 %v117
    %212 = vmatpush.msra.mxu0 %v115
    %213 = vmatpush.msra.mxu0 %v113
    %214 = vmatpush.msra.mxu0 %v111
    %215 = vmatpush.msra.mxu0 %v109
    %216 = vmatpush.msra.mxu0 %v107
    %217 = vmatpush.msra.mxu0 %v105
    %218 = vmatpush.msra.mxu0 %v103
    %219 = vmatpush.msra.mxu0 %v101
    %220 = vmatpush.msra.mxu0 %v99
    %221 = vmatpush.msra.mxu0 %v97
    %222 = vmatpush.msra.mxu0 %v95
    %223 = vmatmul.f32.gmra.mxu0 %v31
    %v224 = vpop.f32.mrf.mxu0
    %v225 = vadd.f32 %v130, %v224
    %226 = vmatmul.f32.gmra.mxu0 %v32
    %v227 = vpop.f32.mrf.mxu0
    %v228 = vadd.f32 %v135, %v227
    %229 = vmatmul.f32.gmra.mxu0 %v33
    %v230 = vpop.f32.mrf.mxu0
    %v231 = vadd.f32 %v140, %v230
    %232 = vmatmul.f32.gmra.mxu0 %v34
    %v233 = vpop.f32.mrf.mxu0
    %v234 = vadd.f32 %v145, %v233
    %235 = vmatmul.f32.gmra.mxu0 %v35
    %v236 = vpop.f32.mrf.mxu0
    %v237 = vadd.f32 %v150, %v236
    %238 = vmatmul.f32.gmra.mxu0 %v36
    %v239 = vpop.f32.mrf.mxu0
    %v240 = vadd.f32 %v155, %v239
    %241 = vmatmul.f32.gmra.mxu0 %v37
    %v242 = vpop.f32.mrf.mxu0
    %v243 = vadd.f32 %v160, %v242
    %244 = vmatmul.f32.gmra.mxu0 %v38
    %v245 = vpop.f32.mrf.mxu0
    %v246 = vadd.f32 %v165, %v245
    %247 = vmatmul.f32.gmra.mxu0 %v39
    %v248 = vpop.f32.mrf.mxu0
    %v249 = vadd.f32 %v170, %v248
    %250 = vmatmul.f32.gmra.mxu0 %v40
    %v251 = vpop.f32.mrf.mxu0
    %v252 = vadd.f32 %v175, %v251
    %253 = vmatmul.f32.gmra.mxu0 %v41
    %v254 = vpop.f32.mrf.mxu0
    %v255 = vadd.f32 %v180, %v254
    %256 = vmatmul.f32.gmra.mxu0 %v42
    %v257 = vpop.f32.mrf.mxu0
    %v258 = vadd.f32 %v185, %v257
    %259 = vmatmul.f32.gmra.mxu0 %v43
    %v260 = vpop.f32.mrf.mxu0
    %v261 = vadd.f32 %v190, %v260
    %262 = vmatmul.f32.gmra.mxu0 %v44
    %v263 = vpop.f32.mrf.mxu0
    %v264 = vadd.f32 %v195, %v263
    %265 = vmatmul.f32.gmra.mxu0 %v45
    %v266 = vpop.f32.mrf.mxu0
    %v267 = vadd.f32 %v200, %v266
    %268 = vmatmul.f32.gmra.mxu0 %v46
    %v269 = vpop.f32.mrf.mxu0
    %v270 = vadd.f32 %v205, %v269
    %271 = vdwg.mxu0
    %272 = vmatpush.msra.mxu0 %v126
    %273 = vmatpush.msra.mxu0 %v124
    %274 = vmatpush.msra.mxu0 %v122
    %275 = vmatpush.msra.mxu0 %v120
    %276 = vmatpush.msra.mxu0 %v118
    %277 = vmatpush.msra.mxu0 %v116
    %278 = vmatpush.msra.mxu0 %v114
    %279 = vmatpush.msra.mxu0 %v112
    %280 = vmatpush.msra.mxu0 %v110
    %281 = vmatpush.msra.mxu0 %v108
    %282 = vmatpush.msra.mxu0 %v106
    %283 = vmatpush.msra.mxu0 %v104
    %284 = vmatpush.msra.mxu0 %v102
    %285 = vmatpush.msra.mxu0 %v100
    %286 = vmatpush.msra.mxu0 %v98
    %287 = vmatpush.msra.mxu0 %v96
    %288 = vmatmul.f32.gmra.mxu0 %v31
    %v289 = vpop.f32.mrf.mxu0
    %v290 = vadd.f32 %v130, %v289
    %291 = vmatmul.f32.gmra.mxu0 %v32
    %v292 = vpop.f32.mrf.mxu0
    %v293 = vadd.f32 %v135, %v292
    %294 = vmatmul.f32.gmra.mxu0 %v33
    %v295 = vpop.f32.mrf.mxu0
    %v296 = vadd.f32 %v140, %v295
    %297 = vmatmul.f32.gmra.mxu0 %v34
    %v298 = vpop.f32.mrf.mxu0
    %v299 = vadd.f32 %v145, %v298
    %300 = vmatmul.f32.gmra.mxu0 %v35
    %v301 = vpop.f32.mrf.mxu0
    %v302 = vadd.f32 %v150, %v301
    %303 = vmatmul.f32.gmra.mxu0 %v36
    %v304 = vpop.f32.mrf.mxu0
    %v305 = vadd.f32 %v155, %v304
    %306 = vmatmul.f32.gmra.mxu0 %v37
    %v307 = vpop.f32.mrf.mxu0
    %v308 = vadd.f32 %v160, %v307
    %309 = vmatmul.f32.gmra.mxu0 %v38
    %v310 = vpop.f32.mrf.mxu0
    %v311 = vadd.f32 %v165, %v310
    %312 = vmatmul.f32.gmra.mxu0 %v39
    %v313 = vpop.f32.mrf.mxu0
    %v314 = vadd.f32 %v170, %v313
    %315 = vmatmul.f32.gmra.mxu0 %v40
    %v316 = vpop.f32.mrf.mxu0
    %v317 = vadd.f32 %v175, %v316
    %318 = vmatmul.f32.gmra.mxu0 %v41
    %v319 = vpop.f32.mrf.mxu0
    %v320 = vadd.f32 %v180, %v319
    %321 = vmatmul.f32.gmra.mxu0 %v42
    %v322 = vpop.f32.mrf.mxu0
    %v323 = vadd.f32 %v185, %v322
    %324 = vmatmul.f32.gmra.mxu0 %v43
    %v325 = vpop.f32.mrf.mxu0
    %v326 = vadd.f32 %v190, %v325
    %327 = vmatmul.f32.gmra.mxu0 %v44
    %v328 = vpop.f32.mrf.mxu0
    %v329 = vadd.f32 %v195, %v328
    %330 = vmatmul.f32.gmra.mxu0 %v45
    %v331 = vpop.f32.mrf.mxu0
    %v332 = vadd.f32 %v200, %v331
    %333 = vmatmul.f32.gmra.mxu0 %v46
    %v334 = vpop.f32.mrf.mxu0
    %v335 = vadd.f32 %v205, %v334
    %336 = vdwg.mxu0
    %v337 = vmax.f32 %v225, 0.0
    %v338 = vmax.f32 %v290, 0.0
    %v339 = vmax.f32 %v228, 0.0
    %v340 = vmax.f32 %v293, 0.0
    %v341 = vmax.f32 %v231, 0.0
    %v342 = vmax.f32 %v296, 0.0
    %v343 = vmax.f32 %v234, 0.0
    %v344 = vmax.f32 %v299, 0.0
    %v345 = vmax.f32 %v237, 0.0
    %v346 = vmax.f32 %v302, 0.0
    %v347 = vmax.f32 %v240, 0.0
    %v348 = vmax.f32 %v305, 0.0
    %v349 = vmax.f32 %v243, 0.0
    %v350 = vmax.f32 %v308, 0.0
    %v351 = vmax.f32 %v246, 0.0
    %v352 = vmax.f32 %v311, 0.0
    %v353 = vmax.f32 %v249, 0.0
    %v354 = vmax.f32 %v314, 0.0
    %v355 = vmax.f32 %v252, 0.0
    %v356 = vmax.f32 %v317, 0.0
    %v357 = vmax.f32 %v255, 0.0
    %v358 = vmax.f32 %v320, 0.0
    %v359 = vmax.f32 %v258, 0.0
    %v360 = vmax.f32 %v323, 0.0
    %v361 = vmax.f32 %v261, 0.0
    %v362 = vmax.f32 %v326, 0.0
    %v363 = vmax.f32 %v264, 0.0
    %v364 = vmax.f32 %v329, 0.0
    %v365 = vmax.f32 %v267, 0.0
    %v366 = vmax.f32 %v332, 0.0
    %v367 = vmax.f32 %v270, 0.0
    %v368 = vmax.f32 %v335, 0.0
    %369 = vmatpush.msra.mxu0 %v367
    %370 = vmatpush.msra.mxu0 %v365
    %371 = vmatpush.msra.mxu0 %v363
    %372 = vmatpush.msra.mxu0 %v361
    %373 = vmatpush.msra.mxu0 %v359
    %374 = vmatpush.msra.mxu0 %v357
    %375 = vmatpush.msra.mxu0 %v355
    %376 = vmatpush.msra.mxu0 %v353
    %377 = vmatpush.msra.mxu0 %v351
    %378 = vmatpush.msra.mxu0 %v349
    %379 = vmatpush.msra.mxu0 %v347
    %380 = vmatpush.msra.mxu0 %v345
    %381 = vmatpush.msra.mxu0 %v343
    %382 = vmatpush.msra.mxu0 %v341
    %383 = vmatpush.msra.mxu0 %v339
    %384 = vmatpush.msra.mxu0 %v337
    %385 = vmatmul.f32.gmra.mxu0 %v31
    %v386 = vpop.f32.mrf.mxu0
    %v387 = vadd.f32 %v130, %v386
    %388 = vmatmul.f32.gmra.mxu0 %v32
    %v389 = vpop.f32.mrf.mxu0
    %v390 = vadd.f32 %v135, %v389
    %391 = vmatmul.f32.gmra.mxu0 %v33
    %v392 = vpop.f32.mrf.mxu0
    %v393 = vadd.f32 %v140, %v392
    %394 = vmatmul.f32.gmra.mxu0 %v34
    %v395 = vpop.f32.mrf.mxu0
    %v396 = vadd.f32 %v145, %v395
    %397 = vmatmul.f32.gmra.mxu0 %v35
    %v398 = vpop.f32.mrf.mxu0
    %v399 = vadd.f32 %v150, %v398
    %400 = vmatmul.f32.gmra.mxu0 %v36
    %v401 = vpop.f32.mrf.mxu0
    %v402 = vadd.f32 %v155, %v401
    %403 = vmatmul.f32.gmra.mxu0 %v37
    %v404 = vpop.f32.mrf.mxu0
    %v405 = vadd.f32 %v160, %v404
    %406 = vmatmul.f32.gmra.mxu0 %v38
    %v407 = vpop.f32.mrf.mxu0
    %v408 = vadd.f32 %v165, %v407
    %409 = vmatmul.f32.gmra.mxu0 %v39
    %v410 = vpop.f32.mrf.mxu0
    %v411 = vadd.f32 %v170, %v410
    %412 = vmatmul.f32.gmra.mxu0 %v40
    %v413 = vpop.f32.mrf.mxu0
    %v414 = vadd.f32 %v175, %v413
    %415 = vmatmul.f32.gmra.mxu0 %v41
    %v416 = vpop.f32.mrf.mxu0
    %v417 = vadd.f32 %v180, %v416
    %418 = vmatmul.f32.gmra.mxu0 %v42
    %v419 = vpop.f32.mrf.mxu0
    %v420 = vadd.f32 %v185, %v419
    %421 = vmatmul.f32.gmra.mxu0 %v43
    %v422 = vpop.f32.mrf.mxu0
    %v423 = vadd.f32 %v190, %v422
    %424 = vmatmul.f32.gmra.mxu0 %v44
    %v425 = vpop.f32.mrf.mxu0
    %v426 = vadd.f32 %v195, %v425
    %427 = vmatmul.f32.gmra.mxu0 %v45
    %v428 = vpop.f32.mrf.mxu0
    %v429 = vadd.f32 %v200, %v428
    %430 = vmatmul.f32.gmra.mxu0 %v46
    %v431 = vpop.f32.mrf.mxu0
    %v432 = vadd.f32 %v205, %v431
    %433 = vdwg.mxu0
    %434 = vmatpush.msra.mxu0 %v368
    %435 = vmatpush.msra.mxu0 %v366
    %436 = vmatpush.msra.mxu0 %v364
    %437 = vmatpush.msra.mxu0 %v362
    %438 = vmatpush.msra.mxu0 %v360
    %439 = vmatpush.msra.mxu0 %v358
    %440 = vmatpush.msra.mxu0 %v356
    %441 = vmatpush.msra.mxu0 %v354
    %442 = vmatpush.msra.mxu0 %v352
    %443 = vmatpush.msra.mxu0 %v350
    %444 = vmatpush.msra.mxu0 %v348
    %445 = vmatpush.msra.mxu0 %v346
    %446 = vmatpush.msra.mxu0 %v344
    %447 = vmatpush.msra.mxu0 %v342
    %448 = vmatpush.msra.mxu0 %v340
    %449 = vmatpush.msra.mxu0 %v338
    %450 = vmatmul.f32.gmra.mxu0 %v31
    %v451 = vpop.f32.mrf.mxu0
    %v452 = vadd.f32 %v130, %v451
    %453 = vmatmul.f32.gmra.mxu0 %v32
    %v454 = vpop.f32.mrf.mxu0
    %v455 = vadd.f32 %v135, %v454
    %456 = vmatmul.f32.gmra.mxu0 %v33
    %v457 = vpop.f32.mrf.mxu0
    %v458 = vadd.f32 %v140, %v457
    %459 = vmatmul.f32.gmra.mxu0 %v34
    %v460 = vpop.f32.mrf.mxu0
    %v461 = vadd.f32 %v145, %v460
    %462 = vmatmul.f32.gmra.mxu0 %v35
    %v463 = vpop.f32.mrf.mxu0
    %v464 = vadd.f32 %v150, %v463
    %465 = vmatmul.f32.gmra.mxu0 %v36
    %v466 = vpop.f32.mrf.mxu0
    %v467 = vadd.f32 %v155, %v466
    %468 = vmatmul.f32.gmra.mxu0 %v37
    %v469 = vpop.f32.mrf.mxu0
    %v470 = vadd.f32 %v160, %v469
    %471 = vmatmul.f32.gmra.mxu0 %v38
    %v472 = vpop.f32.mrf.mxu0
    %v473 = vadd.f32 %v165, %v472
    %474 = vmatmul.f32.gmra.mxu0 %v39
    %v475 = vpop.f32.mrf.mxu0
    %v476 = vadd.f32 %v170, %v475
    %477 = vmatmul.f32.gmra.mxu0 %v40
    %v478 = vpop.f32.mrf.mxu0
    %v479 = vadd.f32 %v175, %v478
    %480 = vmatmul.f32.gmra.mxu0 %v41
    %v481 = vpop.f32.mrf.mxu0
    %v482 = vadd.f32 %v180, %v481
    %483 = vmatmul.f32.gmra.mxu0 %v42
    %v484 = vpop.f32.mrf.mxu0
    %v485 = vadd.f32 %v185, %v484
    %486 = vmatmul.f32.gmra.mxu0 %v43
    %v487 = vpop.f32.mrf.mxu0
    %v488 = vadd.f32 %v190, %v487
    %489 = vmatmul.f32.gmra.mxu0 %v44
    %v490 = vpop.f32.mrf.mxu0
    %v491 = vadd.f32 %v195, %v490
    %492 = vmatmul.f32.gmra.mxu0 %v45
    %v493 = vpop.f32.mrf.mxu0
    %v494 = vadd.f32 %v200, %v493
    %495 = vmatmul.f32.gmra.mxu0 %v46
    %v496 = vpop.f32.mrf.mxu0
    %v497 = vadd.f32 %v205, %v496
    %498 = vdwg.mxu0
    %499 = vst [vmem:[#allocation5] sm:$0xff] %v387
    %500 = vst [vmem:[#allocation5 + $0x8] sm:$0xff] %v452
    %501 = vst [vmem:[#allocation5 + $0x10] sm:$0xff] %v390
    %502 = vst [vmem:[#allocation5 + $0x18] sm:$0xff] %v455
    %503 = vst [vmem:[#allocation5 + $0x20] sm:$0xff] %v393
    %504 = vst [vmem:[#allocation5 + $0x28] sm:$0xff] %v458
    %505 = vst [vmem:[#allocation5 + $0x30] sm:$0xff] %v396
    %506 = vst [vmem:[#allocation5 + $0x38] sm:$0xff] %v461
    %507 = vst [vmem:[#allocation5 + $0x40] sm:$0xff] %v399
    %508 = vst [vmem:[#allocation5 + $0x48] sm:$0xff] %v464
    %509 = vst [vmem:[#allocation5 + $0x50] sm:$0xff] %v402
    %510 = vst [vmem:[#allocation5 + $0x58] sm:$0xff] %v467
    %511 = vst [vmem:[#allocation5 + $0x60] sm:$0xff] %v405
    %512 = vst [vmem:[#allocation5 + $0x68] sm:$0xff] %v470
    %513 = vst [vmem:[#allocation5 + $0x70] sm:$0xff] %v408
    %514 = vst [vmem:[#allocation5 + $0x78] sm:$0xff] %v473
    %515 = vst [vmem:[#allocation5 + $0x80] sm:$0xff] %v411
    %516 = vst [vmem:[#allocation5 + $0x88] sm:$0xff] %v476
    %517 = vst [vmem:[#allocation5 + $0x90] sm:$0xff] %v414
    %518 = vst [vmem:[#allocation5 + $0x98] sm:$0xff] %v479
    %519 = vst [vmem:[#allocation5 + $0xa0] sm:$0xff] %v417
    %520 = vst [vmem:[#allocation5 + $0xa8] sm:$0xff] %v482
    %521 = vst [vmem:[#allocation5 + $0xb0] sm:$0xff] %v420
    %522 = vst [vmem:[#allocation5 + $0xb8] sm:$0xff] %v485
    %523 = vst [vmem:[#allocation5 + $0xc0] sm:$0xff] %v423
    %524 = vst [vmem:[#allocation5 + $0xc8] sm:$0xff] %v488
    %525 = vst [vmem:[#allocation5 + $0xd0] sm:$0xff] %v426
    %526 = vst [vmem:[#allocation5 + $0xd8] sm:$0xff] %v491
    %527 = vst [vmem:[#allocation5 + $0xe0] sm:$0xff] %v429
    %528 = vst [vmem:[#allocation5 + $0xe8] sm:$0xff] %v494
    %529 = vst [vmem:[#allocation5 + $0xf0] sm:$0xff] %v432
    %530 = vst [vmem:[#allocation5 + $0xf8] sm:$0xff] %v497
    %s531 = scalar_lea.vmem [#allocation2], 256
    %v532 = vld [vmem:[%s531] sm:$0xff]
    %v533 = vld [vmem:[%s531 + $0x8] sm:$0xff]
    %v534 = vld [vmem:[%s531 + $0x10] sm:$0xff]
    %v535 = vld [vmem:[%s531 + $0x18] sm:$0xff]
    %v536 = vld [vmem:[%s531 + $0x20] sm:$0xff]
    %v537 = vld [vmem:[%s531 + $0x28] sm:$0xff]
    %v538 = vld [vmem:[%s531 + $0x30] sm:$0xff]
    %v539 = vld [vmem:[%s531 + $0x38] sm:$0xff]
    %v540 = vld [vmem:[%s531 + $0x40] sm:$0xff]
    %v541 = vld [vmem:[%s531 + $0x48] sm:$0xff]
    %v542 = vld [vmem:[%s531 + $0x50] sm:$0xff]
    %v543 = vld [vmem:[%s531 + $0x58] sm:$0xff]
    %v544 = vld [vmem:[%s531 + $0x60] sm:$0xff]
    %v545 = vld [vmem:[%s531 + $0x68] sm:$0xff]
    %v546 = vld [vmem:[%s531 + $0x70] sm:$0xff]
    %v547 = vld [vmem:[%s531 + $0x78] sm:$0xff]
    %v548 = vld [vmem:[%s531 + $0x80] sm:$0xff]
    %v549 = vld [vmem:[%s531 + $0x88] sm:$0xff]
    %v550 = vld [vmem:[%s531 + $0x90] sm:$0xff]
    %v551 = vld [vmem:[%s531 + $0x98] sm:$0xff]
    %v552 = vld [vmem:[%s531 + $0xa0] sm:$0xff]
    %v553 = vld [vmem:[%s531 + $0xa8] sm:$0xff]
    %v554 = vld [vmem:[%s531 + $0xb0] sm:$0xff]
    %v555 = vld [vmem:[%s531 + $0xb8] sm:$0xff]
    %v556 = vld [vmem:[%s531 + $0xc0] sm:$0xff]
    %v557 = vld [vmem:[%s531 + $0xc8] sm:$0xff]
    %v558 = vld [vmem:[%s531 + $0xd0] sm:$0xff]
    %v559 = vld [vmem:[%s531 + $0xd8] sm:$0xff]
    %v560 = vld [vmem:[%s531 + $0xe0] sm:$0xff]
    %v561 = vld [vmem:[%s531 + $0xe8] sm:$0xff]
    %v562 = vld [vmem:[%s531 + $0xf0] sm:$0xff]
    %v563 = vld [vmem:[%s531 + $0xf8] sm:$0xff]
    %v564 = vmax.f32 %v532, 0.0
    %v565 = vmax.f32 %v533, 0.0
    %v566 = vmax.f32 %v534, 0.0
    %v567 = vmax.f32 %v535, 0.0
    %v568 = vmax.f32 %v536, 0.0
    %v569 = vmax.f32 %v537, 0.0
    %v570 = vmax.f32 %v538, 0.0
    %v571 = vmax.f32 %v539, 0.0
    %v572 = vmax.f32 %v540, 0.0
    %v573 = vmax.f32 %v541, 0.0
    %v574 = vmax.f32 %v542, 0.0
    %v575 = vmax.f32 %v543, 0.0
    %v576 = vmax.f32 %v544, 0.0
    %v577 = vmax.f32 %v545, 0.0
    %v578 = vmax.f32 %v546, 0.0
    %v579 = vmax.f32 %v547, 0.0
    %v580 = vmax.f32 %v548, 0.0
    %v581 = vmax.f32 %v549, 0.0
    %v582 = vmax.f32 %v550, 0.0
    %v583 = vmax.f32 %v551, 0.0
    %v584 = vmax.f32 %v552, 0.0
    %v585 = vmax.f32 %v553, 0.0
    %v586 = vmax.f32 %v554, 0.0
    %v587 = vmax.f32 %v555, 0.0
    %v588 = vmax.f32 %v556, 0.0
    %v589 = vmax.f32 %v557, 0.0
    %v590 = vmax.f32 %v558, 0.0
    %v591 = vmax.f32 %v559, 0.0
    %v592 = vmax.f32 %v560, 0.0
    %v593 = vmax.f32 %v561, 0.0
    %v594 = vmax.f32 %v562, 0.0
    %v595 = vmax.f32 %v563, 0.0
    %596 = vmatpush.msra.mxu0 %v594
    %597 = vmatpush.msra.mxu0 %v592
    %598 = vmatpush.msra.mxu0 %v590
    %599 = vmatpush.msra.mxu0 %v588
    %600 = vmatpush.msra.mxu0 %v586
    %601 = vmatpush.msra.mxu0 %v584
    %602 = vmatpush.msra.mxu0 %v582
    %603 = vmatpush.msra.mxu0 %v580
    %604 = vmatpush.msra.mxu0 %v578
    %605 = vmatpush.msra.mxu0 %v576
    %606 = vmatpush.msra.mxu0 %v574
    %607 = vmatpush.msra.mxu0 %v572
    %608 = vmatpush.msra.mxu0 %v570
    %609 = vmatpush.msra.mxu0 %v568
    %610 = vmatpush.msra.mxu0 %v566
    %611 = vmatpush.msra.mxu0 %v564
    %612 = vmatmul.f32.gmra.mxu0 %v31
    %v613 = vpop.f32.mrf.mxu0
    %v614 = vadd.f32 %v130, %v613
    %615 = vmatmul.f32.gmra.mxu0 %v32
    %v616 = vpop.f32.mrf.mxu0
    %v617 = vadd.f32 %v135, %v616
    %618 = vmatmul.f32.gmra.mxu0 %v33
    %v619 = vpop.f32.mrf.mxu0
    %v620 = vadd.f32 %v140, %v619
    %621 = vmatmul.f32.gmra.mxu0 %v34
    %v622 = vpop.f32.mrf.mxu0
    %v623 = vadd.f32 %v145, %v622
    %624 = vmatmul.f32.gmra.mxu0 %v35
    %v625 = vpop.f32.mrf.mxu0
    %v626 = vadd.f32 %v150, %v625
    %627 = vmatmul.f32.gmra.mxu0 %v36
    %v628 = vpop.f32.mrf.mxu0
    %v629 = vadd.f32 %v155, %v628
    %630 = vmatmul.f32.gmra.mxu0 %v37
    %v631 = vpop.f32.mrf.mxu0
    %v632 = vadd.f32 %v160, %v631
    %633 = vmatmul.f32.gmra.mxu0 %v38
    %v634 = vpop.f32.mrf.mxu0
    %v635 = vadd.f32 %v165, %v634
    %636 = vmatmul.f32.gmra.mxu0 %v39
    %v637 = vpop.f32.mrf.mxu0
    %v638 = vadd.f32 %v170, %v637
    %639 = vmatmul.f32.gmra.mxu0 %v40
    %v640 = vpop.f32.mrf.mxu0
    %v641 = vadd.f32 %v175, %v640
    %642 = vmatmul.f32.gmra.mxu0 %v41
    %v643 = vpop.f32.mrf.mxu0
    %v644 = vadd.f32 %v180, %v643
    %645 = vmatmul.f32.gmra.mxu0 %v42
    %v646 = vpop.f32.mrf.mxu0
    %v647 = vadd.f32 %v185, %v646
    %648 = vmatmul.f32.gmra.mxu0 %v43
    %v649 = vpop.f32.mrf.mxu0
    %v650 = vadd.f32 %v190, %v649
    %651 = vmatmul.f32.gmra.mxu0 %v44
    %v652 = vpop.f32.mrf.mxu0
    %v653 = vadd.f32 %v195, %v652
    %654 = vmatmul.f32.gmra.mxu0 %v45
    %v655 = vpop.f32.mrf.mxu0
    %v656 = vadd.f32 %v200, %v655
    %657 = vmatmul.f32.gmra.mxu0 %v46
    %v658 = vpop.f32.mrf.mxu0
    %v659 = vadd.f32 %v205, %v658
    %660 = vdwg.mxu0
    %661 = vmatpush.msra.mxu0 %v595
    %662 = vmatpush.msra.mxu0 %v593
    %663 = vmatpush.msra.mxu0 %v591
    %664 = vmatpush.msra.mxu0 %v589
    %665 = vmatpush.msra.mxu0 %v587
    %666 = vmatpush.msra.mxu0 %v585
    %667 = vmatpush.msra.mxu0 %v583
    %668 = vmatpush.msra.mxu0 %v581
    %669 = vmatpush.msra.mxu0 %v579
    %670 = vmatpush.msra.mxu0 %v577
    %671 = vmatpush.msra.mxu0 %v575
    %672 = vmatpush.msra.mxu0 %v573
    %673 = vmatpush.msra.mxu0 %v571
    %674 = vmatpush.msra.mxu0 %v569
    %675 = vmatpush.msra.mxu0 %v567
    %676 = vmatpush.msra.mxu0 %v565
    %677 = vmatmul.f32.gmra.mxu0 %v31
    %v678 = vpop.f32.mrf.mxu0
    %v679 = vadd.f32 %v130, %v678
    %680 = vmatmul.f32.gmra.mxu0 %v32
    %v681 = vpop.f32.mrf.mxu0
    %v682 = vadd.f32 %v135, %v681
    %683 = vmatmul.f32.gmra.mxu0 %v33
    %v684 = vpop.f32.mrf.mxu0
    %v685 = vadd.f32 %v140, %v684
    %686 = vmatmul.f32.gmra.mxu0 %v34
    %v687 = vpop.f32.mrf.mxu0
    %v688 = vadd.f32 %v145, %v687
    %689 = vmatmul.f32.gmra.mxu0 %v35
    %v690 = vpop.f32.mrf.mxu0
    %v691 = vadd.f32 %v150, %v690
    %692 = vmatmul.f32.gmra.mxu0 %v36
    %v693 = vpop.f32.mrf.mxu0
    %v694 = vadd.f32 %v155, %v693
    %695 = vmatmul.f32.gmra.mxu0 %v37
    %v696 = vpop.f32.mrf.mxu0
    %v697 = vadd.f32 %v160, %v696
    %698 = vmatmul.f32.gmra.mxu0 %v38
    %v699 = vpop.f32.mrf.mxu0
    %v700 = vadd.f32 %v165, %v699
    %701 = vmatmul.f32.gmra.mxu0 %v39
    %v702 = vpop.f32.mrf.mxu0
    %v703 = vadd.f32 %v170, %v702
    %704 = vmatmul.f32.gmra.mxu0 %v40
    %v705 = vpop.f32.mrf.mxu0
    %v706 = vadd.f32 %v175, %v705
    %707 = vmatmul.f32.gmra.mxu0 %v41
    %v708 = vpop.f32.mrf.mxu0
    %v709 = vadd.f32 %v180, %v708
    %710 = vmatmul.f32.gmra.mxu0 %v42
    %v711 = vpop.f32.mrf.mxu0
    %v712 = vadd.f32 %v185, %v711
    %713 = vmatmul.f32.gmra.mxu0 %v43
    %v714 = vpop.f32.mrf.mxu0
    %v715 = vadd.f32 %v190, %v714
    %716 = vmatmul.f32.gmra.mxu0 %v44
    %v717 = vpop.f32.mrf.mxu0
    %v718 = vadd.f32 %v195, %v717
    %719 = vmatmul.f32.gmra.mxu0 %v45
    %v720 = vpop.f32.mrf.mxu0
    %v721 = vadd.f32 %v200, %v720
    %722 = vmatmul.f32.gmra.mxu0 %v46
    %v723 = vpop.f32.mrf.mxu0
    %v724 = vadd.f32 %v205, %v723
    %725 = vdwg.mxu0
    %v726 = vmax.f32 %v614, 0.0
    %v727 = vmax.f32 %v679, 0.0
    %v728 = vmax.f32 %v617, 0.0
    %v729 = vmax.f32 %v682, 0.0
    %v730 = vmax.f32 %v620, 0.0
    %v731 = vmax.f32 %v685, 0.0
    %v732 = vmax.f32 %v623, 0.0
    %v733 = vmax.f32 %v688, 0.0
    %v734 = vmax.f32 %v626, 0.0
    %v735 = vmax.f32 %v691, 0.0
    %v736 = vmax.f32 %v629, 0.0
    %v737 = vmax.f32 %v694, 0.0
    %v738 = vmax.f32 %v632, 0.0
    %v739 = vmax.f32 %v697, 0.0
    %v740 = vmax.f32 %v635, 0.0
    %v741 = vmax.f32 %v700, 0.0
    %v742 = vmax.f32 %v638, 0.0
    %v743 = vmax.f32 %v703, 0.0
    %v744 = vmax.f32 %v641, 0.0
    %v745 = vmax.f32 %v706, 0.0
    %v746 = vmax.f32 %v644, 0.0
    %v747 = vmax.f32 %v709, 0.0
    %v748 = vmax.f32 %v647, 0.0
    %v749 = vmax.f32 %v712, 0.0
    %v750 = vmax.f32 %v650, 0.0
    %v751 = vmax.f32 %v715, 0.0
    %v752 = vmax.f32 %v653, 0.0
    %v753 = vmax.f32 %v718, 0.0
    %v754 = vmax.f32 %v656, 0.0
    %v755 = vmax.f32 %v721, 0.0
    %v756 = vmax.f32 %v659, 0.0
    %v757 = vmax.f32 %v724, 0.0
    %758 = vmatpush.msra.mxu0 %v756
    %759 = vmatpush.msra.mxu0 %v754
    %760 = vmatpush.msra.mxu0 %v752
    %761 = vmatpush.msra.mxu0 %v750
    %762 = vmatpush.msra.mxu0 %v748
    %763 = vmatpush.msra.mxu0 %v746
    %764 = vmatpush.msra.mxu0 %v744
    %765 = vmatpush.msra.mxu0 %v742
    %766 = vmatpush.msra.mxu0 %v740
    %767 = vmatpush.msra.mxu0 %v738
    %768 = vmatpush.msra.mxu0 %v736
    %769 = vmatpush.msra.mxu0 %v734
    %770 = vmatpush.msra.mxu0 %v732
    %771 = vmatpush.msra.mxu0 %v730
    %772 = vmatpush.msra.mxu0 %v728
    %773 = vmatpush.msra.mxu0 %v726
    %774 = vmatmul.f32.gmra.mxu0 %v31
    %v775 = vpop.f32.mrf.mxu0
    %v776 = vadd.f32 %v130, %v775
    %777 = vmatmul.f32.gmra.mxu0 %v32
    %v778 = vpop.f32.mrf.mxu0
    %v779 = vadd.f32 %v135, %v778
    %780 = vmatmul.f32.gmra.mxu0 %v33
    %v781 = vpop.f32.mrf.mxu0
    %v782 = vadd.f32 %v140, %v781
    %783 = vmatmul.f32.gmra.mxu0 %v34
    %v784 = vpop.f32.mrf.mxu0
    %v785 = vadd.f32 %v145, %v784
    %786 = vmatmul.f32.gmra.mxu0 %v35
    %v787 = vpop.f32.mrf.mxu0
    %v788 = vadd.f32 %v150, %v787
    %789 = vmatmul.f32.gmra.mxu0 %v36
    %v790 = vpop.f32.mrf.mxu0
    %v791 = vadd.f32 %v155, %v790
    %792 = vmatmul.f32.gmra.mxu0 %v37
    %v793 = vpop.f32.mrf.mxu0
    %v794 = vadd.f32 %v160, %v793
    %795 = vmatmul.f32.gmra.mxu0 %v38
    %v796 = vpop.f32.mrf.mxu0
    %v797 = vadd.f32 %v165, %v796
    %798 = vmatmul.f32.gmra.mxu0 %v39
    %v799 = vpop.f32.mrf.mxu0
    %v800 = vadd.f32 %v170, %v799
    %801 = vmatmul.f32.gmra.mxu0 %v40
    %v802 = vpop.f32.mrf.mxu0
    %v803 = vadd.f32 %v175, %v802
    %804 = vmatmul.f32.gmra.mxu0 %v41
    %v805 = vpop.f32.mrf.mxu0
    %v806 = vadd.f32 %v180, %v805
    %807 = vmatmul.f32.gmra.mxu0 %v42
    %v808 = vpop.f32.mrf.mxu0
    %v809 = vadd.f32 %v185, %v808
    %810 = vmatmul.f32.gmra.mxu0 %v43
    %v811 = vpop.f32.mrf.mxu0
    %v812 = vadd.f32 %v190, %v811
    %813 = vmatmul.f32.gmra.mxu0 %v44
    %v814 = vpop.f32.mrf.mxu0
    %v815 = vadd.f32 %v195, %v814
    %816 = vmatmul.f32.gmra.mxu0 %v45
    %v817 = vpop.f32.mrf.mxu0
    %v818 = vadd.f32 %v200, %v817
    %819 = vmatmul.f32.gmra.mxu0 %v46
    %v820 = vpop.f32.mrf.mxu0
    %v821 = vadd.f32 %v205, %v820
    %822 = vdwg.mxu0
    %823 = vmatpush.msra.mxu0 %v757
    %824 = vmatpush.msra.mxu0 %v755
    %825 = vmatpush.msra.mxu0 %v753
    %826 = vmatpush.msra.mxu0 %v751
    %827 = vmatpush.msra.mxu0 %v749
    %828 = vmatpush.msra.mxu0 %v747
    %829 = vmatpush.msra.mxu0 %v745
    %830 = vmatpush.msra.mxu0 %v743
    %831 = vmatpush.msra.mxu0 %v741
    %832 = vmatpush.msra.mxu0 %v739
    %833 = vmatpush.msra.mxu0 %v737
    %834 = vmatpush.msra.mxu0 %v735
    %835 = vmatpush.msra.mxu0 %v733
    %836 = vmatpush.msra.mxu0 %v731
    %837 = vmatpush.msra.mxu0 %v729
    %838 = vmatpush.msra.mxu0 %v727
    %839 = vmatmul.f32.gmra.mxu0 %v31
    %v840 = vpop.f32.mrf.mxu0
    %v841 = vadd.f32 %v130, %v840
    %842 = vmatmul.f32.gmra.mxu0 %v32
    %v843 = vpop.f32.mrf.mxu0
    %v844 = vadd.f32 %v135, %v843
    %845 = vmatmul.f32.gmra.mxu0 %v33
    %v846 = vpop.f32.mrf.mxu0
    %v847 = vadd.f32 %v140, %v846
    %848 = vmatmul.f32.gmra.mxu0 %v34
    %v849 = vpop.f32.mrf.mxu0
    %v850 = vadd.f32 %v145, %v849
    %851 = vmatmul.f32.gmra.mxu0 %v35
    %v852 = vpop.f32.mrf.mxu0
    %v853 = vadd.f32 %v150, %v852
    %854 = vmatmul.f32.gmra.mxu0 %v36
    %v855 = vpop.f32.mrf.mxu0
    %v856 = vadd.f32 %v155, %v855
    %857 = vmatmul.f32.gmra.mxu0 %v37
    %v858 = vpop.f32.mrf.mxu0
    %v859 = vadd.f32 %v160, %v858
    %860 = vmatmul.f32.gmra.mxu0 %v38
    %v861 = vpop.f32.mrf.mxu0
    %v862 = vadd.f32 %v165, %v861
    %863 = vmatmul.f32.gmra.mxu0 %v39
    %v864 = vpop.f32.mrf.mxu0
    %v865 = vadd.f32 %v170, %v864
    %866 = vmatmul.f32.gmra.mxu0 %v40
    %v867 = vpop.f32.mrf.mxu0
    %v868 = vadd.f32 %v175, %v867
    %869 = vmatmul.f32.gmra.mxu0 %v41
    %v870 = vpop.f32.mrf.mxu0
    %v871 = vadd.f32 %v180, %v870
    %872 = vmatmul.f32.gmra.mxu0 %v42
    %v873 = vpop.f32.mrf.mxu0
    %v874 = vadd.f32 %v185, %v873
    %875 = vmatmul.f32.gmra.mxu0 %v43
    %v876 = vpop.f32.mrf.mxu0
    %v877 = vadd.f32 %v190, %v876
    %878 = vmatmul.f32.gmra.mxu0 %v44
    %v879 = vpop.f32.mrf.mxu0
    %v880 = vadd.f32 %v195, %v879
    %881 = vmatmul.f32.gmra.mxu0 %v45
    %v882 = vpop.f32.mrf.mxu0
    %v883 = vadd.f32 %v200, %v882
    %884 = vmatmul.f32.gmra.mxu0 %v46
    %v885 = vpop.f32.mrf.mxu0
    %v886 = vadd.f32 %v205, %v885
    %887 = vdwg.mxu0
    %s888 = scalar_lea.vmem [#allocation5], 256
    %889 = vst [vmem:[%s888] sm:$0xff] %v776
    %890 = vst [vmem:[%s888 + $0x8] sm:$0xff] %v841
    %891 = vst [vmem:[%s888 + $0x10] sm:$0xff] %v779
    %892 = vst [vmem:[%s888 + $0x18] sm:$0xff] %v844
    %893 = vst [vmem:[%s888 + $0x20] sm:$0xff] %v782
    %894 = vst [vmem:[%s888 + $0x28] sm:$0xff] %v847
    %895 = vst [vmem:[%s888 + $0x30] sm:$0xff] %v785
    %896 = vst [vmem:[%s888 + $0x38] sm:$0xff] %v850
    %897 = vst [vmem:[%s888 + $0x40] sm:$0xff] %v788
    %898 = vst [vmem:[%s888 + $0x48] sm:$0xff] %v853
    %899 = vst [vmem:[%s888 + $0x50] sm:$0xff] %v791
    %900 = vst [vmem:[%s888 + $0x58] sm:$0xff] %v856
    %901 = vst [vmem:[%s888 + $0x60] sm:$0xff] %v794
    %902 = vst [vmem:[%s888 + $0x68] sm:$0xff] %v859
    %903 = vst [vmem:[%s888 + $0x70] sm:$0xff] %v797
    %904 = vst [vmem:[%s888 + $0x78] sm:$0xff] %v862
    %905 = vst [vmem:[%s888 + $0x80] sm:$0xff] %v800
    %906 = vst [vmem:[%s888 + $0x88] sm:$0xff] %v865
    %907 = vst [vmem:[%s888 + $0x90] sm:$0xff] %v803
    %908 = vst [vmem:[%s888 + $0x98] sm:$0xff] %v868
    %909 = vst [vmem:[%s888 + $0xa0] sm:$0xff] %v806
    %910 = vst [vmem:[%s888 + $0xa8] sm:$0xff] %v871
    %911 = vst [vmem:[%s888 + $0xb0] sm:$0xff] %v809
    %912 = vst [vmem:[%s888 + $0xb8] sm:$0xff] %v874
    %913 = vst [vmem:[%s888 + $0xc0] sm:$0xff] %v812
    %914 = vst [vmem:[%s888 + $0xc8] sm:$0xff] %v877
    %915 = vst [vmem:[%s888 + $0xd0] sm:$0xff] %v815
    %916 = vst [vmem:[%s888 + $0xd8] sm:$0xff] %v880
    %917 = vst [vmem:[%s888 + $0xe0] sm:$0xff] %v818
    %918 = vst [vmem:[%s888 + $0xe8] sm:$0xff] %v883
    %919 = vst [vmem:[%s888 + $0xf0] sm:$0xff] %v821
    %920 = vst [vmem:[%s888 + $0xf8] sm:$0xff] %v886
    // Predicated region
    $region18: #{tpu_custom_call.1} parent=1 // pred_check
      _
    $region19: #{tpu_custom_call.1} parent=1 // pred_check_branch
      %922 = sbr.rel (0) target = $region21
    $region20: #{tpu_custom_call.1} parent=1 // pred_region
      %924 = vsyncadd [#allocation4], 0
      %s925 = sshll.u32 [#allocation5], 4
      %s926 = int_to_ptr.vmem [resolvable:$true] %s925
      %s927 = sshll.u32 %s3, 4
      %s928 = int_to_ptr.hbm [resolvable:$true] %s927
      %933 = dma.vmem_to_hbm [thread:$0]  %s926, 8192, %s928, [#allocation4], 256, 256, 16
    $region21: #{tpu_custom_call.1} parent=1 // pred_fallthru
      _
    // Predicated region
    $region22: #{tpu_custom_call.1} parent=1 // pred_check
      _
    $region23: #{tpu_custom_call.1} parent=1 // pred_check_branch
      %935 = sbr.rel (0) target = $region25
    $region24: #{tpu_custom_call.1} parent=1 // pred_region
      %937 = dma.done [#allocation4], 8192
    $region25: #{tpu_custom_call.1} parent=1 // pred_fallthru
      _
    %938 = vsyncpa [#allocation3], 1
    %939 = vsyncpa [#allocation4], 1

</llo_original>
